<compile_context>
chip_gen: v7x
topology: tpu7x:2x2x1
jax: 0.10.0
libtpu: 0.0.40
codegen_flags: <defaults>
</compile_context>

<pallas_src>
import jax
import jax.numpy as jnp
from jax.experimental import pallas as pl
from jax.experimental.pallas import tpu as pltpu


def critic_kernel(xT_ref, w1_ref, b1_ref, w2_ref, b2_ref, w3_ref, b3_ref, o_ref):
    # Layer 1: (64, D) @ (D, tile_b) -> (64, tile_b); cast input to bf16 in-kernel.
    x = xT_ref[...].astype(jnp.bfloat16)
    h1 = jnp.dot(w1_ref[...], x, preferred_element_type=jnp.float32)
    h1 = jnp.maximum(h1 + b1_ref[...], 0.0)            # b1 (64,1) broadcast, f32 VPU
    # Layer 2: (64, 64) @ (64, tile_b) -> (64, tile_b)
    h2 = jnp.dot(w2_ref[...], h1.astype(jnp.bfloat16),
                 preferred_element_type=jnp.float32)
    h2 = jnp.maximum(h2 + b2_ref[...], 0.0)
    # Value head: (1, 64) @ (64, tile_b) -> lane-dense (1, tile_b); no transpose.
    v = jnp.dot(w3_ref[...], h2.astype(jnp.bfloat16),
                preferred_element_type=jnp.float32)
    o_ref[...] = v + b3_ref[0]                          # b3 is an SMEM scalar


def _round_up(x, m):
    return -(-x // m) * m


def _choose_tiling(batch, tile_b_max):
    """Balanced, padding-free batch tiling.

    Small batches: single full-extent tile (block dim == full array dim, so no
    128-multiple requirement). Large batches: >=2 (even) tiles of a balanced,
    128-multiple width so v7x megacore can shard the parallel axis and ragged
    waste stays small.
    """
    if batch <= 512:
        return batch, 1
    b_r = _round_up(batch, 128)
    num_tiles = max(-(-b_r // tile_b_max), 2)
    if num_tiles % 2 == 1:
        num_tiles += 1
    tile_b = _round_up(-(-batch // num_tiles), 128)
    return tile_b, num_tiles


def critic_forward(state, params, *, tile_b_max=2048):
    """state: (B, input_dims) f32.  Returns (B, 1) f32 value estimates."""
    B, D = state.shape
    w1 = params["w1"].astype(jnp.bfloat16)          # (64, D)   PyTorch layout
    w2 = params["w2"].astype(jnp.bfloat16)          # (64, 64)
    w3 = params["w3"].astype(jnp.bfloat16)          # (1, 64)
    b1 = params["b1"].reshape(-1, 1)                # (64, 1) f32, sublane bias
    b2 = params["b2"].reshape(-1, 1)                # (64, 1) f32
    b3 = params["b3"].reshape(1)                    # (1,)   f32 -> SMEM scalar

    tile_b, num_tiles = _choose_tiling(B, tile_b_max)

    # Single fused transpose in the wrapper puts the batch on the lane axis;
    # the dtype cast happens in-kernel so the state only crosses HBM as f32 once
    # extra (no separate cast pass, no pad pass).
    xT = state.T                                     # (D, B) f32

    resident = lambda arr: pl.BlockSpec(arr.shape, lambda i: (0, 0))

    out = pl.pallas_call(
        critic_kernel,
        out_shape=jax.ShapeDtypeStruct((1, B), jnp.float32),
        grid=(num_tiles,),
        in_specs=[
            pl.BlockSpec((D, tile_b), lambda i: (0, i)),   # state tile (feature-major)
            resident(w1),
            resident(b1),
            resident(w2),
            resident(b2),
            resident(w3),
            pl.BlockSpec(memory_space=pltpu.MemorySpace.SMEM),  # b3 scalar
        ],
        out_specs=pl.BlockSpec((1, tile_b), lambda i: (0, i)),
        compiler_params=pltpu.CompilerParams(
            dimension_semantics=("parallel",)),
    )(xT, w1, b1, w2, b2, w3, b3)

    return out[0, :].reshape(B, 1)


def init_params(key, input_dims, fc1_dims=64, fc2_dims=64):
    """PyTorch-Linear-style init U[-1/sqrt(fan_in), 1/sqrt(fan_in)].
    Weights stored PyTorch-style as (out_features, in_features); biases (out,)."""
    ks = jax.random.split(key, 6)

    def lin(kw, kb, fan_in, fan_out):
        bound = 1.0 / jnp.sqrt(jnp.float32(fan_in))
        w = jax.random.uniform(kw, (fan_out, fan_in), jnp.float32, -bound, bound)
        b = jax.random.uniform(kb, (fan_out,), jnp.float32, -bound, bound)
        return w, b

    w1, b1 = lin(ks[0], ks[1], input_dims, fc1_dims)
    w2, b2 = lin(ks[2], ks[3], fc1_dims, fc2_dims)
    w3, b3 = lin(ks[4], ks[5], fc2_dims, 1)
    return {"w1": w1, "b1": b1, "w2": w2, "b2": b2, "w3": w3, "b3": b3}


def ref_forward_f32(state, params):
    h1 = jnp.maximum(state @ params["w1"].T + params["b1"], 0.0)
    h2 = jnp.maximum(h1 @ params["w2"].T + params["b2"], 0.0)
    return h2 @ params["w3"].T + params["b3"]


def ref_forward_bf16(state, params):
    bf = jnp.bfloat16
    h1 = jnp.dot(state.astype(bf), params["w1"].T.astype(bf),
                 preferred_element_type=jnp.float32) + params["b1"]
    h1 = jnp.maximum(h1, 0.0)
    h2 = jnp.dot(h1.astype(bf), params["w2"].T.astype(bf),
                 preferred_element_type=jnp.float32) + params["b2"]
    h2 = jnp.maximum(h2, 0.0)
    return jnp.dot(h2.astype(bf), params["w3"].T.astype(bf),
                   preferred_element_type=jnp.float32) + params["b3"]


if __name__ == "__main__":
    key = jax.random.PRNGKey(0)
    k_state, k_params, k_state2 = jax.random.split(key, 3)

    # Small shapes consistent with the module (PPO state vector, small batch).
    B, input_dims = 8, 32
    state = jax.random.normal(k_state, (B, input_dims), dtype=jnp.float32)
    params = init_params(k_params, input_dims)

    value = jax.block_until_ready(critic_forward(state, params))
    assert value.shape == (B, 1)
    assert jnp.allclose(value, ref_forward_bf16(state, params), atol=2e-3, rtol=2e-3)
    assert jnp.allclose(value, ref_forward_f32(state, params), atol=5e-2, rtol=5e-2)

    # Exercise the multi-tile path: ragged batch, balanced 128-multiple tiles,
    # padding-free boundary blocks, >=2 parallel grid steps.
    B2 = 2500
    state2 = jax.random.normal(k_state2, (B2, input_dims), dtype=jnp.float32)
    value2 = jax.block_until_ready(critic_forward(state2, params))
    assert value2.shape == (B2, 1)
    assert jnp.allclose(value2, ref_forward_bf16(state2, params), atol=2e-3, rtol=2e-3)

    # TODO(synk): Adam optimizer step and checkpoint save/load from the PyTorch
    # module are training/IO concerns, not part of the forward kernel.
    print("KERNEL_OK")
</pallas_src>

<mosaic_0001>
module attributes {stable_mosaic.version = 11 : i64} {
  func.func @critic_kernel(%arg0: i32, %arg1: memref<32x8xf32, #tpu.memory_space<vmem>>, %arg2: memref<64x32xbf16, #tpu.memory_space<vmem>>, %arg3: memref<64x1xf32, #tpu.memory_space<vmem>>, %arg4: memref<64x64xbf16, #tpu.memory_space<vmem>>, %arg5: memref<64x1xf32, #tpu.memory_space<vmem>>, %arg6: memref<1x64xbf16, #tpu.memory_space<vmem>>, %arg7: memref<1xf32, #tpu.memory_space<smem>>, %arg8: memref<1x8xf32, #tpu.memory_space<vmem>>) attributes {dimension_semantics = [#tpu.dimension_semantics<parallel>], iteration_bounds = array<i64: 1>, scalar_prefetch = 0 : i64, scratch_operands = 0 : i64, tpu.core_type = #tpu.core_type<tc>, window_params = [{transform_indices = @transform_0, window_bounds = array<i64: 32, 8>}, {pipeline_mode = #tpu.pipeline_mode<synchronous>, transform_indices = @transform_1, window_bounds = array<i64: 64, 32>}, {pipeline_mode = #tpu.pipeline_mode<synchronous>, transform_indices = @transform_2, window_bounds = array<i64: 64, 1>}, {pipeline_mode = #tpu.pipeline_mode<synchronous>, transform_indices = @transform_3, window_bounds = array<i64: 64, 64>}, {pipeline_mode = #tpu.pipeline_mode<synchronous>, transform_indices = @transform_4, window_bounds = array<i64: 64, 1>}, {pipeline_mode = #tpu.pipeline_mode<synchronous>, transform_indices = @transform_5, window_bounds = array<i64: 1, 64>}, {transform_indices = @transform_6, window_bounds = array<i64: 1>}, {transform_indices = @transform_7, window_bounds = array<i64: 1, 8>}]} {
    %c0 = arith.constant 0 : index
    %c0_0 = arith.constant 0 : index
    %0 = vector.load %arg1[%c0, %c0_0] : memref<32x8xf32, #tpu.memory_space<vmem>>, vector<32x8xf32>
    %1 = arith.truncf %0 : vector<32x8xf32> to vector<32x8xbf16>
    %c0_1 = arith.constant 0 : index
    %c0_2 = arith.constant 0 : index
    %2 = vector.load %arg2[%c0_1, %c0_2] : memref<64x32xbf16, #tpu.memory_space<vmem>>, vector<64x32xbf16>
    %cst = arith.constant dense<0.000000e+00> : vector<64x8xf32>
    %3 = tpu.matmul %2, %1, %cst {dimension_numbers = #tpu.dot_dimension_numbers<[1], [0], [0], [1], [0, 0, 1, 1], [], []>} : vector<64x32xbf16>, vector<32x8xbf16>, vector<64x8xf32> -> vector<64x8xf32>
    %c0_3 = arith.constant 0 : index
    %c0_4 = arith.constant 0 : index
    %4 = vector.load %arg3[%c0_3, %c0_4] : memref<64x1xf32, #tpu.memory_space<vmem>>, vector<64x1xf32>
    %5 = vector.broadcast %4 : vector<64x1xf32> to vector<64x8xf32>
    %6 = arith.addf %3, %5 : vector<64x8xf32>
    %cst_5 = arith.constant 0.000000e+00 : f32
    %7 = vector.broadcast %cst_5 : f32 to vector<64x8xf32>
    %8 = arith.maximumf %6, %7 : vector<64x8xf32>
    %c0_6 = arith.constant 0 : index
    %c0_7 = arith.constant 0 : index
    %9 = vector.load %arg4[%c0_6, %c0_7] : memref<64x64xbf16, #tpu.memory_space<vmem>>, vector<64x64xbf16>
    %10 = arith.truncf %8 : vector<64x8xf32> to vector<64x8xbf16>
    %cst_8 = arith.constant dense<0.000000e+00> : vector<64x8xf32>
    %11 = tpu.matmul %9, %10, %cst_8 {dimension_numbers = #tpu.dot_dimension_numbers<[1], [0], [0], [1], [0, 0, 1, 1], [], []>} : vector<64x64xbf16>, vector<64x8xbf16>, vector<64x8xf32> -> vector<64x8xf32>
    %c0_9 = arith.constant 0 : index
    %c0_10 = arith.constant 0 : index
    %12 = vector.load %arg5[%c0_9, %c0_10] : memref<64x1xf32, #tpu.memory_space<vmem>>, vector<64x1xf32>
    %13 = vector.broadcast %12 : vector<64x1xf32> to vector<64x8xf32>
    %14 = arith.addf %11, %13 : vector<64x8xf32>
    %cst_11 = arith.constant 0.000000e+00 : f32
    %15 = vector.broadcast %cst_11 : f32 to vector<64x8xf32>
    %16 = arith.maximumf %14, %15 : vector<64x8xf32>
    %c0_12 = arith.constant 0 : index
    %c0_13 = arith.constant 0 : index
    %17 = vector.load %arg6[%c0_12, %c0_13] : memref<1x64xbf16, #tpu.memory_space<vmem>>, vector<1x64xbf16>
    %18 = arith.truncf %16 : vector<64x8xf32> to vector<64x8xbf16>
    %cst_14 = arith.constant dense<0.000000e+00> : vector<1x8xf32>
    %19 = tpu.matmul %17, %18, %cst_14 {dimension_numbers = #tpu.dot_dimension_numbers<[1], [0], [0], [1], [0, 0, 1, 1], [], []>} : vector<1x64xbf16>, vector<64x8xbf16>, vector<1x8xf32> -> vector<1x8xf32>
    %c0_15 = arith.constant 0 : index
    %20 = memref.load %arg7[%c0_15] : memref<1xf32, #tpu.memory_space<smem>>
    %21 = vector.broadcast %20 : f32 to vector<1x8xf32>
    %22 = arith.addf %19, %21 : vector<1x8xf32>
    %c0_16 = arith.constant 0 : index
    %c0_17 = arith.constant 0 : index
    %23 = vector.load %arg8[%c0_16, %c0_17] : memref<1x8xf32, #tpu.memory_space<vmem>>, vector<1x8xf32>
    tpu.vector_store %arg8[%c0_16, %c0_17], %22 {strides = array<i32>} : memref<1x8xf32, #tpu.memory_space<vmem>>, vector<1x8xf32>,
    return
  }
  func.func @transform_0(%arg0: i32) -> (i32, i32) {
    %c0_i32 = arith.constant 0 : i32
    %c0_i32_0 = arith.constant 0 : i32
    return %c0_i32, %arg0 : i32, i32
  }
  func.func @transform_1(%arg0: i32) -> (i32, i32) {
    %c0_i32 = arith.constant 0 : i32
    %c0_i32_0 = arith.constant 0 : i32
    %c0_i32_1 = arith.constant 0 : i32
    return %c0_i32, %c0_i32_0 : i32, i32
  }
  func.func @transform_2(%arg0: i32) -> (i32, i32) {
    %c0_i32 = arith.constant 0 : i32
    %c0_i32_0 = arith.constant 0 : i32
    %c0_i32_1 = arith.constant 0 : i32
    return %c0_i32, %c0_i32_0 : i32, i32
  }
  func.func @transform_3(%arg0: i32) -> (i32, i32) {
    %c0_i32 = arith.constant 0 : i32
    %c0_i32_0 = arith.constant 0 : i32
    %c0_i32_1 = arith.constant 0 : i32
    return %c0_i32, %c0_i32_0 : i32, i32
  }
  func.func @transform_4(%arg0: i32) -> (i32, i32) {
    %c0_i32 = arith.constant 0 : i32
    %c0_i32_0 = arith.constant 0 : i32
    %c0_i32_1 = arith.constant 0 : i32
    return %c0_i32, %c0_i32_0 : i32, i32
  }
  func.func @transform_5(%arg0: i32) -> (i32, i32) {
    %c0_i32 = arith.constant 0 : i32
    %c0_i32_0 = arith.constant 0 : i32
    %c0_i32_1 = arith.constant 0 : i32
    return %c0_i32, %c0_i32_0 : i32, i32
  }
  func.func @transform_6(%arg0: i32) -> i32 {
    %c0_i32 = arith.constant 0 : i32
    %c0_i32_0 = arith.constant 0 : i32
    return %c0_i32 : i32
  }
  func.func @transform_7(%arg0: i32) -> (i32, i32) {
    %c0_i32 = arith.constant 0 : i32
    %c0_i32_0 = arith.constant 0 : i32
    return %c0_i32, %arg0 : i32, i32
  }
}

</mosaic_0001>

<llo_original>
// kernel: tpu_custom_call.1
$region0: #{tpu_custom_call.1}
  #allocation0 [shape = 'u32[]', space=smem, size = 0x4, offset = 0x4, fixed_abs, tag = 'smem constant byte address 0x4 - core index']
  #allocation1 [shape = 'u32[144,128]{1,0:T(1,128)}', space=vmem, size = 0x12000, scoped, tag = 'internal scratch']
  #allocation2 [shape = 'f32[1]{0:T(128)S(6)}', space=smem, size = 0x200, scoped, tag = 'scoped memory for tpu_custom_call.1']
  %s0 = inlined_call_operand.vmem [shape: f32[32,8], index: 0, kind: input, shape index: {}]
  %s1 = inlined_call_operand.vmem [shape: bf16[64,32], index: 1, kind: input, shape index: {}]
  %s2 = inlined_call_operand.vmem [shape: f32[64,1], index: 2, kind: input, shape index: {}]
  %s3 = inlined_call_operand.vmem [shape: bf16[64,64], index: 3, kind: input, shape index: {}]
  %s4 = inlined_call_operand.vmem [shape: f32[64,1], index: 4, kind: input, shape index: {}]
  %s5 = inlined_call_operand.vmem [shape: bf16[1,64], index: 5, kind: input, shape index: {}]
  %s6 = inlined_call_operand.<no memory space> [shape: f32[1], index: 6, kind: input, shape index: {}]
  %s7 = inlined_call_operand.hbm [shape: f32[1,8], index: 7, kind: output, shape index: {}]
  %s8 = sld [smem:[#allocation0]]
  $region38: #{tpu_custom_call.1} parent=0
    _
  %s10 = ssub.s32 1, %s8
  %s11 = scalar_select 0, %s10, %s8
  %12 = sst [smem:[#allocation2]] %s6
  $region1: #{tpu_custom_call.1} parent=0
    #allocation3 [shape = 'u8[512]{0}', space=vmem, size = 0x400, scoped, tag = 'output window, operand 0, single buffered']
    #allocation4 [shape = 's32[1]{0}', space=sflag, size = 0x4, scoped, tag = 'scoped memory for tpu_custom_call.1']
    %13 = vsyncpa [#allocation4], 0
    // Predicated region
    $region2: #{tpu_custom_call.1} parent=1 // pred_check
      _
    $region3: #{tpu_custom_call.1} parent=1 // pred_check_branch
      %15 = sbr.rel (0) target = $region5
    $region4: #{tpu_custom_call.1} parent=1 // pred_region
      _
    $region5: #{tpu_custom_call.1} parent=1 // pred_fallthru
      _
    // Predicated region
    $region6: #{tpu_custom_call.1} parent=1 // pred_check
      _
    $region7: #{tpu_custom_call.1} parent=1 // pred_check_branch
      %17 = sbr.rel (0) target = $region9
    $region8: #{tpu_custom_call.1} parent=1 // pred_region
      _
    $region9: #{tpu_custom_call.1} parent=1 // pred_fallthru
      _
    // Predicated region
    $region10: #{tpu_custom_call.1} parent=1 // pred_check
      _
    $region11: #{tpu_custom_call.1} parent=1 // pred_check_branch
      %19 = sbr.rel (0) target = $region13
    $region12: #{tpu_custom_call.1} parent=1 // pred_region
      _
    $region13: #{tpu_custom_call.1} parent=1 // pred_fallthru
      _
    // Predicated region
    $region14: #{tpu_custom_call.1} parent=1 // pred_check
      _
    $region15: #{tpu_custom_call.1} parent=1 // pred_check_branch
      %21 = sbr.rel (0) target = $region17
    $region16: #{tpu_custom_call.1} parent=1 // pred_region
      _
    $region17: #{tpu_custom_call.1} parent=1 // pred_fallthru
      _
    // Predicated region
    $region18: #{tpu_custom_call.1} parent=1 // pred_check
      _
    $region19: #{tpu_custom_call.1} parent=1 // pred_check_branch
      %23 = sbr.rel (0) target = $region21
    $region20: #{tpu_custom_call.1} parent=1 // pred_region
      _
    $region21: #{tpu_custom_call.1} parent=1 // pred_fallthru
      _
    // Predicated region
    $region22: #{tpu_custom_call.1} parent=1 // pred_check
      _
    $region23: #{tpu_custom_call.1} parent=1 // pred_check_branch
      %25 = sbr.rel (0) target = $region25
    $region24: #{tpu_custom_call.1} parent=1 // pred_region
      _
    $region25: #{tpu_custom_call.1} parent=1 // pred_fallthru
      _
    // Predicated region
    $region26: #{tpu_custom_call.1} parent=1 // pred_check
      _
    $region27: #{tpu_custom_call.1} parent=1 // pred_check_branch
      %27 = sbr.rel (0) target = $region29
    $region28: #{tpu_custom_call.1} parent=1 // pred_region
      _
    $region29: #{tpu_custom_call.1} parent=1 // pred_fallthru
      _
    %v29 = vld [vmem:[%s0] sm:$0xff]
    %v30 = vld [vmem:[%s0 + $0x8] sm:$0xff]
    %v31 = vld [vmem:[%s0 + $0x10] sm:$0xff]
    %v32 = vld [vmem:[%s0 + $0x18] sm:$0xff]
    %v33 = vpack.c.bf16 %v30, %v29
    %v34 = vpack.c.bf16 %v32, %v31
    %v35 = vld [vmem:[%s1] sm:$0xf]
    %v36 = vld [vmem:[%s1 + $0x4] sm:$0xf]
    %v37 = vld [vmem:[%s1 + $0x8] sm:$0xf]
    %v38 = vld [vmem:[%s1 + $0xc] sm:$0xf]
    %v39 = vld [vmem:[%s1 + $0x10] sm:$0xf]
    %v40 = vld [vmem:[%s1 + $0x14] sm:$0xf]
    %v41 = vld [vmem:[%s1 + $0x18] sm:$0xf]
    %v42 = vld [vmem:[%s1 + $0x1c] sm:$0xf]
    %v43 = vld [vmem:[%s2] sm:$0xff]
    %v44 = vld [vmem:[%s2 + $0x8] sm:$0xff]
    %v45 = vld [vmem:[%s2 + $0x10] sm:$0xff]
    %v46 = vld [vmem:[%s2 + $0x18] sm:$0xff]
    %v47 = vld [vmem:[%s2 + $0x20] sm:$0xff]
    %v48 = vld [vmem:[%s2 + $0x28] sm:$0xff]
    %v49 = vld [vmem:[%s2 + $0x30] sm:$0xff]
    %v50 = vld [vmem:[%s2 + $0x38] sm:$0xff]
    %52 = vset.pattern.permute.xlu0 0
    %53 = vperm.xlu0 %52, %v43
    %v54 = vpop.permute.xlu0 %53
    %57 = vset.pattern.permute.xlu0 0
    %58 = vperm.xlu0 %57, %v44
    %v59 = vpop.permute.xlu0 %58
    %62 = vset.pattern.permute.xlu0 0
    %63 = vperm.xlu0 %62, %v45
    %v64 = vpop.permute.xlu0 %63
    %67 = vset.pattern.permute.xlu0 0
    %68 = vperm.xlu0 %67, %v46
    %v69 = vpop.permute.xlu0 %68
    %72 = vset.pattern.permute.xlu0 0
    %73 = vperm.xlu0 %72, %v47
    %v74 = vpop.permute.xlu0 %73
    %77 = vset.pattern.permute.xlu0 0
    %78 = vperm.xlu0 %77, %v48
    %v79 = vpop.permute.xlu0 %78
    %82 = vset.pattern.permute.xlu0 0
    %83 = vperm.xlu0 %82, %v49
    %v84 = vpop.permute.xlu0 %83
    %87 = vset.pattern.permute.xlu0 0
    %88 = vperm.xlu0 %87, %v50
    %v89 = vpop.permute.xlu0 %88
    %v99 = vunpack.c.l.b16 %v35
    %v100 = vunpack.c.l.b16 %v36
    %v101 = vunpack.c.l.b16 %v37
    %v102 = vunpack.c.l.b16 %v38
    %v103 = vunpack.c.l.b16 %v39
    %v104 = vunpack.c.l.b16 %v40
    %v105 = vunpack.c.l.b16 %v41
    %v106 = vunpack.c.l.b16 %v42
    %v107 = vpack.c.b16 %v100, %v99
    %v108 = vpack.c.b16 %v102, %v101
    %v109 = vpack.c.b16 %v104, %v103
    %v110 = vpack.c.b16 %v106, %v105
    %vm111 = vcmask 261120
    %v113 = vsel %vm111, %v107, 0
    %v116 = vsel %vm111, %v108, 0
    %v119 = vsel %vm111, %v109, 0
    %v122 = vsel %vm111, %v110, 0
    %124 = vmatprep.subr.bf16.mxu0 0
    %125 = vmatpush1.bf16.msra.mxu0 %v33
    %126 = vmatprep.subr.bf16.mxu0 0
    %127 = vmatpush1.bf16.msra.mxu0 %v34
    %128 = vmatprep.subr.bf16.mxu0 0
    %129 = vmatpush1.bf16.msra.mxu0 0
    %130 = vmatprep.subr.bf16.mxu0 0
    %131 = vmatpush1.bf16.msra.mxu0 0
    %132 = vmatprep.subr.bf16.mxu0 0
    %133 = vmatpush1.bf16.msra.mxu0 0
    %134 = vmatprep.subr.bf16.mxu0 0
    %135 = vmatpush1.bf16.msra.mxu0 0
    %136 = vmatprep.subr.bf16.mxu0 0
    %137 = vmatpush1.bf16.msra.mxu0 0
    %138 = vmatprep.subr.bf16.mxu0 0
    %139 = vmatpush1.bf16.msra.mxu0 0
    %140 = vmatprep.subr.bf16.mxu0 0
    %141 = vmatpush1.bf16.msra.mxu0 0
    %142 = vmatprep.subr.bf16.mxu0 0
    %143 = vmatpush1.bf16.msra.mxu0 0
    %144 = vmatprep.subr.bf16.mxu0 0
    %145 = vmatpush1.bf16.msra.mxu0 0
    %146 = vmatprep.subr.bf16.mxu0 0
    %147 = vmatpush1.bf16.msra.mxu0 0
    %148 = vmatprep.subr.bf16.mxu0 0
    %149 = vmatpush1.bf16.msra.mxu0 0
    %150 = vmatprep.subr.bf16.mxu0 0
    %151 = vmatpush1.bf16.msra.mxu0 0
    %152 = vmatprep.subr.bf16.mxu0 0
    %153 = vmatpush1.bf16.msra.mxu0 0
    %154 = vmatprep.subr.bf16.mxu0 0
    %155 = vmatpush1.bf16.msra.mxu0 0
    %156 = vmatprep.mubr.bf16.mxu0 0
    %157 = vmatmul.mubr.bf16.gmra.mrb[0].mxu0 %v113
    %v158 = vpop.f32.mrb[0].mxu0
    %v159 = vadd.f32 %v54, %v158
    %v160 = vpop.f32.mrb[0].mxu0
    %v161 = vpop.f32.mrb[0].mxu0
    %v162 = vadd.f32 %v59, %v161
    %v163 = vpop.f32.mrb[0].mxu0
    %164 = vmatprep.mubr.bf16.mxu0 0
    %165 = vmatmul.mubr.bf16.gmra.mrb[0].mxu0 %v116
    %v166 = vpop.f32.mrb[0].mxu0
    %v167 = vadd.f32 %v64, %v166
    %v168 = vpop.f32.mrb[0].mxu0
    %v169 = vpop.f32.mrb[0].mxu0
    %v170 = vadd.f32 %v69, %v169
    %v171 = vpop.f32.mrb[0].mxu0
    %172 = vmatprep.mubr.bf16.mxu0 0
    %173 = vmatmul.mubr.bf16.gmra.mrb[0].mxu0 %v119
    %v174 = vpop.f32.mrb[0].mxu0
    %v175 = vadd.f32 %v74, %v174
    %v176 = vpop.f32.mrb[0].mxu0
    %v177 = vpop.f32.mrb[0].mxu0
    %v178 = vadd.f32 %v79, %v177
    %v179 = vpop.f32.mrb[0].mxu0
    %180 = vmatprep.mubr.bf16.mxu0 0
    %181 = vmatmul.mubr.bf16.gmra.mrb[0].mxu0 %v122
    %v182 = vpop.f32.mrb[0].mxu0
    %v183 = vadd.f32 %v84, %v182
    %v184 = vpop.f32.mrb[0].mxu0
    %v185 = vpop.f32.mrb[0].mxu0
    %v186 = vadd.f32 %v89, %v185
    %v187 = vpop.f32.mrb[0].mxu0
    %188 = vdwg.mxu0
    %v189 = vmax.f32 %v159, 0.0
    %v190 = vmax.f32 %v162, 0.0
    %v191 = vmax.f32 %v167, 0.0
    %v192 = vmax.f32 %v170, 0.0
    %v193 = vmax.f32 %v175, 0.0
    %v194 = vmax.f32 %v178, 0.0
    %v195 = vmax.f32 %v183, 0.0
    %v196 = vmax.f32 %v186, 0.0
    %v197 = vld [vmem:[%s3] sm:$0xf]
    %v198 = vld [vmem:[%s3 + $0x4] sm:$0xf]
    %v199 = vld [vmem:[%s3 + $0x8] sm:$0xf]
    %v200 = vld [vmem:[%s3 + $0xc] sm:$0xf]
    %v201 = vld [vmem:[%s3 + $0x10] sm:$0xf]
    %v202 = vld [vmem:[%s3 + $0x14] sm:$0xf]
    %v203 = vld [vmem:[%s3 + $0x18] sm:$0xf]
    %v204 = vld [vmem:[%s3 + $0x1c] sm:$0xf]
    %v205 = vpack.c.bf16 %v190, %v189
    %v206 = vpack.c.bf16 %v192, %v191
    %v207 = vpack.c.bf16 %v194, %v193
    %v208 = vpack.c.bf16 %v196, %v195
    %v209 = vld [vmem:[%s4] sm:$0xff]
    %v210 = vld [vmem:[%s4 + $0x8] sm:$0xff]
    %v211 = vld [vmem:[%s4 + $0x10] sm:$0xff]
    %v212 = vld [vmem:[%s4 + $0x18] sm:$0xff]
    %v213 = vld [vmem:[%s4 + $0x20] sm:$0xff]
    %v214 = vld [vmem:[%s4 + $0x28] sm:$0xff]
    %v215 = vld [vmem:[%s4 + $0x30] sm:$0xff]
    %v216 = vld [vmem:[%s4 + $0x38] sm:$0xff]
    %218 = vset.pattern.permute.xlu0 0
    %219 = vperm.xlu0 %218, %v209
    %v220 = vpop.permute.xlu0 %219
    %223 = vset.pattern.permute.xlu0 0
    %224 = vperm.xlu0 %223, %v210
    %v225 = vpop.permute.xlu0 %224
    %228 = vset.pattern.permute.xlu0 0
    %229 = vperm.xlu0 %228, %v211
    %v230 = vpop.permute.xlu0 %229
    %233 = vset.pattern.permute.xlu0 0
    %234 = vperm.xlu0 %233, %v212
    %v235 = vpop.permute.xlu0 %234
    %238 = vset.pattern.permute.xlu0 0
    %239 = vperm.xlu0 %238, %v213
    %v240 = vpop.permute.xlu0 %239
    %243 = vset.pattern.permute.xlu0 0
    %244 = vperm.xlu0 %243, %v214
    %v245 = vpop.permute.xlu0 %244
    %248 = vset.pattern.permute.xlu0 0
    %249 = vperm.xlu0 %248, %v215
    %v250 = vpop.permute.xlu0 %249
    %253 = vset.pattern.permute.xlu0 0
    %254 = vperm.xlu0 %253, %v216
    %v255 = vpop.permute.xlu0 %254
    %v265 = vunpack.c.l.b16 %v197
    %v266 = vunpack.c.l.b16 %v198
    %v267 = vunpack.c.l.b16 %v199
    %v268 = vunpack.c.l.b16 %v200
    %v269 = vunpack.c.l.b16 %v201
    %v270 = vunpack.c.l.b16 %v202
    %v271 = vunpack.c.l.b16 %v203
    %v272 = vunpack.c.l.b16 %v204
    %v273 = vpack.c.b16 %v266, %v265
    %v274 = vpack.c.b16 %v268, %v267
    %v275 = vpack.c.b16 %v270, %v269
    %v276 = vpack.c.b16 %v272, %v271
    %vm277 = vcmask 523264
    %v279 = vsel %vm277, %v273, 0
    %v282 = vsel %vm277, %v274, 0
    %v285 = vsel %vm277, %v275, 0
    %v288 = vsel %vm277, %v276, 0
    %290 = vmatprep.subr.bf16.mxu0 0
    %291 = vmatpush1.bf16.msra.mxu0 %v205
    %292 = vmatprep.subr.bf16.mxu0 0
    %293 = vmatpush1.bf16.msra.mxu0 %v206
    %294 = vmatprep.subr.bf16.mxu0 0
    %295 = vmatpush1.bf16.msra.mxu0 %v207
    %296 = vmatprep.subr.bf16.mxu0 0
    %297 = vmatpush1.bf16.msra.mxu0 %v208
    %298 = vmatprep.subr.bf16.mxu0 0
    %299 = vmatpush1.bf16.msra.mxu0 0
    %300 = vmatprep.subr.bf16.mxu0 0
    %301 = vmatpush1.bf16.msra.mxu0 0
    %302 = vmatprep.subr.bf16.mxu0 0
    %303 = vmatpush1.bf16.msra.mxu0 0
    %304 = vmatprep.subr.bf16.mxu0 0
    %305 = vmatpush1.bf16.msra.mxu0 0
    %306 = vmatprep.subr.bf16.mxu0 0
    %307 = vmatpush1.bf16.msra.mxu0 0
    %308 = vmatprep.subr.bf16.mxu0 0
    %309 = vmatpush1.bf16.msra.mxu0 0
    %310 = vmatprep.subr.bf16.mxu0 0
    %311 = vmatpush1.bf16.msra.mxu0 0
    %312 = vmatprep.subr.bf16.mxu0 0
    %313 = vmatpush1.bf16.msra.mxu0 0
    %314 = vmatprep.subr.bf16.mxu0 0
    %315 = vmatpush1.bf16.msra.mxu0 0
    %316 = vmatprep.subr.bf16.mxu0 0
    %317 = vmatpush1.bf16.msra.mxu0 0
    %318 = vmatprep.subr.bf16.mxu0 0
    %319 = vmatpush1.bf16.msra.mxu0 0
    %320 = vmatprep.subr.bf16.mxu0 0
    %321 = vmatpush1.bf16.msra.mxu0 0
    %322 = vmatprep.mubr.bf16.mxu0 0
    %323 = vmatmul.mubr.bf16.gmra.mrb[0].mxu0 %v279
    %v324 = vpop.f32.mrb[0].mxu0
    %v325 = vadd.f32 %v220, %v324
    %v326 = vpop.f32.mrb[0].mxu0
    %v327 = vpop.f32.mrb[0].mxu0
    %v328 = vadd.f32 %v225, %v327
    %v329 = vpop.f32.mrb[0].mxu0
    %330 = vmatprep.mubr.bf16.mxu0 0
    %331 = vmatmul.mubr.bf16.gmra.mrb[0].mxu0 %v282
    %v332 = vpop.f32.mrb[0].mxu0
    %v333 = vadd.f32 %v230, %v332
    %v334 = vpop.f32.mrb[0].mxu0
    %v335 = vpop.f32.mrb[0].mxu0
    %v336 = vadd.f32 %v235, %v335
    %v337 = vpop.f32.mrb[0].mxu0
    %338 = vmatprep.mubr.bf16.mxu0 0
    %339 = vmatmul.mubr.bf16.gmra.mrb[0].mxu0 %v285
    %v340 = vpop.f32.mrb[0].mxu0
    %v341 = vadd.f32 %v240, %v340
    %v342 = vpop.f32.mrb[0].mxu0
    %v343 = vpop.f32.mrb[0].mxu0
    %v344 = vadd.f32 %v245, %v343
    %v345 = vpop.f32.mrb[0].mxu0
    %346 = vmatprep.mubr.bf16.mxu0 0
    %347 = vmatmul.mubr.bf16.gmra.mrb[0].mxu0 %v288
    %v348 = vpop.f32.mrb[0].mxu0
    %v349 = vadd.f32 %v250, %v348
    %v350 = vpop.f32.mrb[0].mxu0
    %v351 = vpop.f32.mrb[0].mxu0
    %v352 = vadd.f32 %v255, %v351
    %v353 = vpop.f32.mrb[0].mxu0
    %354 = vdwg.mxu0
    %v355 = vmax.f32 %v325, 0.0
    %v356 = vmax.f32 %v328, 0.0
    %v357 = vmax.f32 %v333, 0.0
    %v358 = vmax.f32 %v336, 0.0
    %v359 = vmax.f32 %v341, 0.0
    %v360 = vmax.f32 %v344, 0.0
    %v361 = vmax.f32 %v349, 0.0
    %v362 = vmax.f32 %v352, 0.0
    %v363 = vld [vmem:[%s5] sm:$0x1]
    %v364 = vpack.c.bf16 %v356, %v355
    %v365 = vpack.c.bf16 %v358, %v357
    %v366 = vpack.c.bf16 %v360, %v359
    %v367 = vpack.c.bf16 %v362, %v361
    %s368 = sld [smem:[#allocation2]]
    %v369 = vstv %s368
    %v371 = vsel %vm277, %v363, 0
    %373 = vmatprep.subr.bf16.mxu0 0
    %374 = vmatpush1.bf16.msra.mxu0 %v364
    %375 = vmatprep.subr.bf16.mxu0 0
    %376 = vmatpush1.bf16.msra.mxu0 %v365
    %377 = vmatprep.subr.bf16.mxu0 0
    %378 = vmatpush1.bf16.msra.mxu0 %v366
    %379 = vmatprep.subr.bf16.mxu0 0
    %380 = vmatpush1.bf16.msra.mxu0 %v367
    %381 = vmatprep.subr.bf16.mxu0 0
    %382 = vmatpush1.bf16.msra.mxu0 0
    %383 = vmatprep.subr.bf16.mxu0 0
    %384 = vmatpush1.bf16.msra.mxu0 0
    %385 = vmatprep.subr.bf16.mxu0 0
    %386 = vmatpush1.bf16.msra.mxu0 0
    %387 = vmatprep.subr.bf16.mxu0 0
    %388 = vmatpush1.bf16.msra.mxu0 0
    %389 = vmatprep.subr.bf16.mxu0 0
    %390 = vmatpush1.bf16.msra.mxu0 0
    %391 = vmatprep.subr.bf16.mxu0 0
    %392 = vmatpush1.bf16.msra.mxu0 0
    %393 = vmatprep.subr.bf16.mxu0 0
    %394 = vmatpush1.bf16.msra.mxu0 0
    %395 = vmatprep.subr.bf16.mxu0 0
    %396 = vmatpush1.bf16.msra.mxu0 0
    %397 = vmatprep.subr.bf16.mxu0 0
    %398 = vmatpush1.bf16.msra.mxu0 0
    %399 = vmatprep.subr.bf16.mxu0 0
    %400 = vmatpush1.bf16.msra.mxu0 0
    %401 = vmatprep.subr.bf16.mxu0 0
    %402 = vmatpush1.bf16.msra.mxu0 0
    %403 = vmatprep.subr.bf16.mxu0 0
    %404 = vmatpush1.bf16.msra.mxu0 0
    %405 = vmatprep.mubr.bf16.mxu0 0
    %406 = vmatmul.mubr.bf16.gmra.mrb[0].mxu0 %v371
    %v407 = vpop.f32.mrb[0].mxu0
    %v408 = vadd.f32 %v369, %v407
    %v409 = vpop.f32.mrb[0].mxu0
    %v410 = vpop.f32.mrb[0].mxu0
    %v411 = vpop.f32.mrb[0].mxu0
    %412 = vdwg.mxu0
    %vm413 = vcmask 57344
    %414 = vst.msk [vmem:[#allocation3] sm:$0x1] %vm413, %v408
    // Predicated region
    $region30: #{tpu_custom_call.1} parent=1 // pred_check
      _
    $region31: #{tpu_custom_call.1} parent=1 // pred_check_branch
      %416 = sbr.rel (0) target = $region33
    $region32: #{tpu_custom_call.1} parent=1 // pred_region
      %s418 = ssub.s32 16, 16
      %419 = vsyncadd [#allocation4], %s418
      %s421 = sshll.u32 [#allocation3], 4
      %s422 = int_to_ptr.vmem [resolvable:$true] %s421
      %424 = dma.vmem_to_hbm [thread:$0]  %s422, 16, %s7, [#allocation4]
    $region33: #{tpu_custom_call.1} parent=1 // pred_fallthru
      _
    // Predicated region
    $region34: #{tpu_custom_call.1} parent=1 // pred_check
      _
    $region35: #{tpu_custom_call.1} parent=1 // pred_check_branch
      %426 = sbr.rel (0) target = $region37
    $region36: #{tpu_custom_call.1} parent=1 // pred_region
      %427 = dma.done [#allocation4], 16
    $region37: #{tpu_custom_call.1} parent=1 // pred_fallthru
      _
    %428 = vsyncpa [#allocation4], 1

</llo_original>
